<compile_context>
chip_gen: v5e
topology: v5e:2x2
jax: 0.10.0
libtpu: 0.0.40
codegen_flags: <defaults>
</compile_context>

<pallas_src>
import jax
import jax.numpy as jnp
from jax.experimental import pallas as pl
from jax.experimental.pallas import tpu as pltpu

IN_F = 64
HID_F = 32
OUT_F = 9


def _mlp_kernel(x_ref, w1_ref, b1_ref, w2_ref, b2_ref, o_ref):
    # x: [tile, in_f], w1: [in_f, hid_f], b1: [1, hid_f] (f32),
    # w2: [hid_f, out_f], b2: [1, out_f] (f32), o: [tile, out_f]
    x = x_ref[...]

    # Linear(64->32) + ReLU   (MXU matmul, f32 accumulation; bias/ReLU in f32,
    # safe on v5e which has no bf16 VPU).
    h = jnp.dot(x, w1_ref[...], preferred_element_type=jnp.float32) + b1_ref[...]
    h = jnp.maximum(h, 0.0)

    # Linear(32->9) + Sigmoid (cast h to the streaming dtype for the MXU;
    # accumulate f32; sigmoid's exp runs on the EUP).
    h = h.astype(w2_ref.dtype)
    z = jnp.dot(h, w2_ref[...], preferred_element_type=jnp.float32) + b2_ref[...]
    o_ref[...] = jax.nn.sigmoid(z).astype(o_ref.dtype)


def _round_up(n, m):
    return ((n + m - 1) // m) * m


def _padded_vmem_bytes(rows, cols, dtype):
    # VMEM blocks are (8, 128)-tiled: lanes pad to 128, sublanes to 8.
    return _round_up(max(rows, 1), 8) * _round_up(cols, 128) * jnp.dtype(dtype).itemsize


def classification_network(x, w1, b1, w2, b2, *, tile_b=8192, pack=None,
                           out_dtype=jnp.float32, core_parallel=False):
    """Fused MLP forward. x: [B, 64] -> out: [B, 9].

    tile_b:        rows per grid step (multiple of 8); big tiles amortize the
                   ~0.35 us per-step overhead.  Sweepable (suggest ~16384 on v7x).
    pack:          rows folded per kernel row (block-diagonal weights). Default:
                   4 if B % 4 == 0 else 2 if B % 2 == 0 else 1.
    out_dtype:     output dtype (f32 default; bf16 halves output writeback).
    core_parallel: use pltpu.CORE_PARALLEL on the batch axis (v7x dual-TC).
    """
    B, in_f0 = x.shape
    assert in_f0 == IN_F, f"expected x[:, {IN_F}], got {x.shape}"
    assert tile_b % 8 == 0 and tile_b >= 8, "tile_b must be a multiple of 8"

    if pack is None:
        pack = 4 if B % 4 == 0 else (2 if B % 2 == 0 else 1)
    assert B % pack == 0
    rows = B // pack
    in_f, hid_f, out_f = IN_F * pack, HID_F * pack, OUT_F * pack

    # Stream x in its HBM dtype (no wrapper-side cast => no extra HBM pass).
    cdt = x.dtype
    w1c = w1.astype(cdt)
    w2c = w2.astype(cdt)
    b1f = jnp.reshape(b1.astype(jnp.float32), (1, HID_F))
    b2f = jnp.reshape(b2.astype(jnp.float32), (1, OUT_F))

    if pack > 1:
        # Row-packing: [B, 64] -> [B/pack, 64*pack] (free, row-major) with
        # block-diagonal weights; output [B/pack, 9*pack] reshapes back to [B, 9].
        xk = x.reshape(rows, in_f)
        w1k = jax.scipy.linalg.block_diag(*([w1c] * pack))
        w2k = jax.scipy.linalg.block_diag(*([w2c] * pack))
        b1k = jnp.tile(b1f, (1, pack))
        b2k = jnp.tile(b2f, (1, pack))
    else:
        xk, w1k, w2k, b1k, b2k = x, w1c, w2c, b1f, b2f

    # Tile selection: single full-array block for small inputs (full-dim blocks
    # are exempt from the (8,128) divisibility rule); otherwise tile_b-row
    # blocks with a Pallas-masked partial last block (no wrapper jnp.pad).
    tile = rows if rows <= tile_b else tile_b
    grid = (pl.cdiv(rows, tile),)

    # Explicit VMEM budget: double-buffered x/out tiles (lane+sublane padded)
    # + resident weights/biases + headroom.  Keeps big tiles off the scoped
    # default cliffs (16 MiB v5e / 32 MiB v6e,v7x).
    vmem_bytes = (
        2 * _padded_vmem_bytes(tile, in_f, cdt)          # x tile (double buffer)
        + 2 * _padded_vmem_bytes(tile, out_f, out_dtype)  # out tile (double buffer)
        + 2 * (_padded_vmem_bytes(in_f, hid_f, cdt)
               + _padded_vmem_bytes(hid_f, out_f, cdt)
               + _padded_vmem_bytes(1, hid_f, jnp.float32)
               + _padded_vmem_bytes(1, out_f, jnp.float32))
        + (2 << 20))                                      # compiler temps headroom

    dims = (pltpu.CORE_PARALLEL,) if core_parallel else ("parallel",)

    itemsize = jnp.dtype(cdt).itemsize
    cost = pl.CostEstimate(
        flops=2 * rows * (in_f * hid_f + hid_f * out_f),
        transcendentals=rows * out_f,                     # exp inside sigmoid
        bytes_accessed=(rows * in_f * itemsize                       # x
                        + (in_f * hid_f + hid_f * out_f) * itemsize  # weights
                        + (hid_f + out_f) * 4                        # biases
                        + rows * out_f * jnp.dtype(out_dtype).itemsize),  # out
    )

    out = pl.pallas_call(
        _mlp_kernel,
        out_shape=jax.ShapeDtypeStruct((rows, out_f), out_dtype),
        grid=grid,
        in_specs=[
            pl.BlockSpec((tile, in_f), lambda i: (i, 0)),    # x tile, pipelined
            pl.BlockSpec((in_f, hid_f), lambda i: (0, 0)),   # w1, VMEM-resident
            pl.BlockSpec((1, hid_f), lambda i: (0, 0)),      # b1, VMEM-resident
            pl.BlockSpec((hid_f, out_f), lambda i: (0, 0)),  # w2, VMEM-resident
            pl.BlockSpec((1, out_f), lambda i: (0, 0)),      # b2, VMEM-resident
        ],
        out_specs=pl.BlockSpec((tile, out_f), lambda i: (i, 0)),
        compiler_params=pltpu.CompilerParams(
            dimension_semantics=dims,
            vmem_limit_bytes=int(vmem_bytes)),
        cost_estimate=cost,
    )(xk, w1k, b1k, w2k, b2k)

    return out.reshape(B, OUT_F)


def init_params(key):
    """Matches PyTorch nn.Linear default init U(-1/sqrt(fan_in), 1/sqrt(fan_in))."""
    k1, k2, k3, k4 = jax.random.split(key, 4)
    bound1 = 1.0 / jnp.sqrt(float(IN_F))
    bound2 = 1.0 / jnp.sqrt(float(HID_F))
    # Stored as [in_features, out_features] (transpose of PyTorch's weight layout).
    w1 = jax.random.uniform(k1, (IN_F, HID_F), jnp.float32, -bound1, bound1)
    b1 = jax.random.uniform(k2, (1, HID_F), jnp.float32, -bound1, bound1)
    w2 = jax.random.uniform(k3, (HID_F, OUT_F), jnp.float32, -bound2, bound2)
    b2 = jax.random.uniform(k4, (1, OUT_F), jnp.float32, -bound2, bound2)
    return w1, b1, w2, b2


def reference(x, w1, b1, w2, b2):
    h = jnp.maximum(x @ w1 + b1, 0.0)
    return jax.nn.sigmoid(h @ w2 + b2)


if __name__ == "__main__":
    key = jax.random.PRNGKey(0)
    k_x, k_x2, k_x3, k_x4, k_p = jax.random.split(key, 5)
    w1, b1, w2, b2 = init_params(k_p)

    # 1) f32, B % 4 == 0 -> row-packed path (pack=4), single full block.
    B = 16
    x = jax.random.normal(k_x, (B, IN_F), dtype=jnp.float32)
    out = jax.block_until_ready(classification_network(x, w1, b1, w2, b2))
    ref = reference(x, w1, b1, w2, b2)
    assert out.shape == (B, OUT_F), out.shape
    assert jnp.allclose(out, ref, atol=1e-5, rtol=1e-5), "packed f32 path mismatch"

    # 2) f32, odd batch -> pack=1, single full-array block (no wrapper pad).
    B2 = 37
    x2 = jax.random.normal(k_x2, (B2, IN_F), dtype=jnp.float32)
    out2 = jax.block_until_ready(classification_network(x2, w1, b1, w2, b2))
    ref2 = reference(x2, w1, b1, w2, b2)
    assert out2.shape == (B2, OUT_F), out2.shape
    assert jnp.allclose(out2, ref2, atol=1e-5, rtol=1e-5), "unpacked f32 path mismatch"

    # 3) multi-step grid with a Pallas-masked partial last block
    #    (exercises the no-jnp.pad path; tiny tile just to force grid > 1).
    B3 = 40
    x3 = jax.random.normal(k_x3, (B3, IN_F), dtype=jnp.float32)
    out3 = jax.block_until_ready(
        classification_network(x3, w1, b1, w2, b2, tile_b=8))
    ref3 = reference(x3, w1, b1, w2, b2)
    assert out3.shape == (B3, OUT_F), out3.shape
    assert jnp.allclose(out3, ref3, atol=1e-5, rtol=1e-5), "partial-block path mismatch"

    # 4) bf16-native input (simulates a bf16 producer -- no wrapper cast of a
    #    materialized f32 x) with bf16 output writeback.
    B4 = 64
    x4 = jax.random.normal(k_x4, (B4, IN_F), dtype=jnp.float32).astype(jnp.bfloat16)
    out4 = jax.block_until_ready(
        classification_network(x4, w1, b1, w2, b2, out_dtype=jnp.bfloat16))
    ref4 = reference(x4.astype(jnp.float32), w1, b1, w2, b2)
    assert out4.shape == (B4, OUT_F), out4.shape
    assert jnp.allclose(out4.astype(jnp.float32), ref4, atol=2e-2, rtol=2e-2), \
        "bf16 path mismatch"

    print("KERNEL_OK")
</pallas_src>

<mosaic_0001>
module attributes {stable_mosaic.version = 11 : i64} {
  func.func @_mlp_kernel(%arg0: i32, %arg1: memref<4x256xf32, #tpu.memory_space<vmem>>, %arg2: memref<256x128xf32, #tpu.memory_space<vmem>>, %arg3: memref<1x128xf32, #tpu.memory_space<vmem>>, %arg4: memref<128x36xf32, #tpu.memory_space<vmem>>, %arg5: memref<1x36xf32, #tpu.memory_space<vmem>>, %arg6: memref<4x36xf32, #tpu.memory_space<vmem>>) attributes {dimension_semantics = [#tpu.dimension_semantics<parallel>], iteration_bounds = array<i64: 1>, scalar_prefetch = 0 : i64, scratch_operands = 0 : i64, tpu.core_type = #tpu.core_type<tc>, window_params = [{transform_indices = @transform_0, window_bounds = array<i64: 4, 256>}, {pipeline_mode = #tpu.pipeline_mode<synchronous>, transform_indices = @transform_1, window_bounds = array<i64: 256, 128>}, {pipeline_mode = #tpu.pipeline_mode<synchronous>, transform_indices = @transform_2, window_bounds = array<i64: 1, 128>}, {pipeline_mode = #tpu.pipeline_mode<synchronous>, transform_indices = @transform_3, window_bounds = array<i64: 128, 36>}, {pipeline_mode = #tpu.pipeline_mode<synchronous>, transform_indices = @transform_4, window_bounds = array<i64: 1, 36>}, {transform_indices = @transform_5, window_bounds = array<i64: 4, 36>}]} {
    %c0 = arith.constant 0 : index
    %c0_0 = arith.constant 0 : index
    %0 = vector.load %arg1[%c0, %c0_0] : memref<4x256xf32, #tpu.memory_space<vmem>>, vector<4x256xf32>
    %c0_1 = arith.constant 0 : index
    %c0_2 = arith.constant 0 : index
    %1 = vector.load %arg2[%c0_1, %c0_2] : memref<256x128xf32, #tpu.memory_space<vmem>>, vector<256x128xf32>
    %cst = arith.constant dense<0.000000e+00> : vector<4x128xf32>
    %2 = tpu.matmul %0, %1, %cst {dimension_numbers = #tpu.dot_dimension_numbers<[1], [0], [0], [1], [0, 0, 1, 1], [], []>} : vector<4x256xf32>, vector<256x128xf32>, vector<4x128xf32> -> vector<4x128xf32>
    %c0_3 = arith.constant 0 : index
    %c0_4 = arith.constant 0 : index
    %3 = vector.load %arg3[%c0_3, %c0_4] : memref<1x128xf32, #tpu.memory_space<vmem>>, vector<1x128xf32>
    %4 = vector.broadcast %3 : vector<1x128xf32> to vector<4x128xf32>
    %5 = arith.addf %2, %4 : vector<4x128xf32>
    %cst_5 = arith.constant 0.000000e+00 : f32
    %6 = vector.broadcast %cst_5 : f32 to vector<4x128xf32>
    %7 = arith.maximumf %5, %6 : vector<4x128xf32>
    %c0_6 = arith.constant 0 : index
    %c0_7 = arith.constant 0 : index
    %8 = vector.load %arg4[%c0_6, %c0_7] : memref<128x36xf32, #tpu.memory_space<vmem>>, vector<128x36xf32>
    %cst_8 = arith.constant dense<0.000000e+00> : vector<4x36xf32>
    %9 = tpu.matmul %7, %8, %cst_8 {dimension_numbers = #tpu.dot_dimension_numbers<[1], [0], [0], [1], [0, 0, 1, 1], [], []>} : vector<4x128xf32>, vector<128x36xf32>, vector<4x36xf32> -> vector<4x36xf32>
    %c0_9 = arith.constant 0 : index
    %c0_10 = arith.constant 0 : index
    %10 = vector.load %arg5[%c0_9, %c0_10] : memref<1x36xf32, #tpu.memory_space<vmem>>, vector<1x36xf32>
    %11 = vector.broadcast %10 : vector<1x36xf32> to vector<4x36xf32>
    %12 = arith.addf %9, %11 : vector<4x36xf32>
    %13 = arith.negf %12 : vector<4x36xf32>
    %14 = math.exp %13 : vector<4x36xf32>
    %cst_11 = arith.constant 1.000000e+00 : f32
    %15 = vector.broadcast %cst_11 : f32 to vector<4x36xf32>
    %16 = arith.addf %15, %14 : vector<4x36xf32>
    %17 = arith.divf %15, %16 : vector<4x36xf32>
    %c0_12 = arith.constant 0 : index
    %c0_13 = arith.constant 0 : index
    %18 = vector.load %arg6[%c0_12, %c0_13] : memref<4x36xf32, #tpu.memory_space<vmem>>, vector<4x36xf32>
    tpu.vector_store %arg6[%c0_12, %c0_13], %17 {strides = array<i32>} : memref<4x36xf32, #tpu.memory_space<vmem>>, vector<4x36xf32>,
    return
  }
  func.func @transform_0(%arg0: i32) -> (i32, i32) {
    %c0_i32 = arith.constant 0 : i32
    %c0_i32_0 = arith.constant 0 : i32
    return %arg0, %c0_i32 : i32, i32
  }
  func.func @transform_1(%arg0: i32) -> (i32, i32) {
    %c0_i32 = arith.constant 0 : i32
    %c0_i32_0 = arith.constant 0 : i32
    %c0_i32_1 = arith.constant 0 : i32
    return %c0_i32, %c0_i32_0 : i32, i32
  }
  func.func @transform_2(%arg0: i32) -> (i32, i32) {
    %c0_i32 = arith.constant 0 : i32
    %c0_i32_0 = arith.constant 0 : i32
    %c0_i32_1 = arith.constant 0 : i32
    return %c0_i32, %c0_i32_0 : i32, i32
  }
  func.func @transform_3(%arg0: i32) -> (i32, i32) {
    %c0_i32 = arith.constant 0 : i32
    %c0_i32_0 = arith.constant 0 : i32
    %c0_i32_1 = arith.constant 0 : i32
    return %c0_i32, %c0_i32_0 : i32, i32
  }
  func.func @transform_4(%arg0: i32) -> (i32, i32) {
    %c0_i32 = arith.constant 0 : i32
    %c0_i32_0 = arith.constant 0 : i32
    %c0_i32_1 = arith.constant 0 : i32
    return %c0_i32, %c0_i32_0 : i32, i32
  }
  func.func @transform_5(%arg0: i32) -> (i32, i32) {
    %c0_i32 = arith.constant 0 : i32
    %c0_i32_0 = arith.constant 0 : i32
    return %arg0, %c0_i32 : i32, i32
  }
}

</mosaic_0001>

<llo_original>
// kernel: tpu_custom_call.1
$region0: #{tpu_custom_call.1}
  #allocation0 [shape = 'u32[]', space=smem, size = 0x4, offset = 0x4, fixed_abs, tag = 'smem constant byte address 0x4 - core index']
  #allocation1 [shape = 'u32[72,128]{1,0:T(1,128)}', space=vmem, size = 0x9000, scoped, tag = 'internal scratch']
  %s0 = inlined_call_operand.vmem [shape: f32[4,256], index: 0, kind: input, shape index: {}]
  %s1 = inlined_call_operand.hbm [shape: f32[256,128], index: 1, kind: input, shape index: {}]
  %s2 = inlined_call_operand.vmem [shape: f32[1,128], index: 2, kind: input, shape index: {}]
  %s3 = inlined_call_operand.vmem [shape: f32[128,36], index: 3, kind: input, shape index: {}]
  %s4 = inlined_call_operand.vmem [shape: f32[1,36], index: 4, kind: input, shape index: {}]
  %s5 = inlined_call_operand.hbm [shape: f32[4,36], index: 5, kind: output, shape index: {}]
  %s6 = sld [smem:[#allocation0]]
  $region34: #{tpu_custom_call.1} parent=0
    _
  %s8 = ssub.s32 1, %s6
  %s9 = scalar_select 0, %s8, %s6
  $region1: #{tpu_custom_call.1} parent=0
    #allocation2 [shape = 'u8[131072]{0}', space=vmem, size = 0x20000, scoped, tag = 'input window, operand 1, single buffered']
    #allocation3 [shape = 's32[1]{0}', space=sflag, size = 0x4, scoped, tag = 'scoped memory for tpu_custom_call.1']
    #allocation4 [shape = 's32[1]{0}', space=sflag, size = 0x4, scoped, tag = 'scoped memory for tpu_custom_call.1']
    #allocation5 [shape = 'u8[2048]{0}', space=vmem, size = 0x800, scoped, tag = 'output window, operand 0, single buffered']
    %10 = vsyncpa [#allocation3], 0
    %11 = vsyncpa [#allocation4], 0
    // Predicated region
    $region2: #{tpu_custom_call.1} parent=1 // pred_check
      _
    $region3: #{tpu_custom_call.1} parent=1 // pred_check_branch
      %13 = sbr.rel (0) target = $region5
    $region4: #{tpu_custom_call.1} parent=1 // pred_region
      _
    $region5: #{tpu_custom_call.1} parent=1 // pred_fallthru
      _
    // Predicated region
    $region6: #{tpu_custom_call.1} parent=1 // pred_check
      _
    $region7: #{tpu_custom_call.1} parent=1 // pred_check_branch
      %15 = sbr.rel (0) target = $region9
    $region8: #{tpu_custom_call.1} parent=1 // pred_region
      %17 = vsyncadd [#allocation3], 0
      %s18 = sshll.u32 %s1, 4
      %s19 = int_to_ptr.hbm [resolvable:$true] %s18
      %s20 = sshll.u32 [#allocation2], 4
      %s21 = int_to_ptr.vmem [resolvable:$true] %s20
      %26 = dma.hbm_to_vmem [thread:$0]  %s19, 4096, %s21, [#allocation3], 128, 128, 8
    $region9: #{tpu_custom_call.1} parent=1 // pred_fallthru
      _
    // Predicated region
    $region10: #{tpu_custom_call.1} parent=1 // pred_check
      _
    $region11: #{tpu_custom_call.1} parent=1 // pred_check_branch
      %28 = sbr.rel (0) target = $region13
    $region12: #{tpu_custom_call.1} parent=1 // pred_region
      _
    $region13: #{tpu_custom_call.1} parent=1 // pred_fallthru
      _
    // Predicated region
    $region14: #{tpu_custom_call.1} parent=1 // pred_check
      _
    $region15: #{tpu_custom_call.1} parent=1 // pred_check_branch
      %30 = sbr.rel (0) target = $region17
    $region16: #{tpu_custom_call.1} parent=1 // pred_region
      _
    $region17: #{tpu_custom_call.1} parent=1 // pred_fallthru
      _
    // Predicated region
    $region18: #{tpu_custom_call.1} parent=1 // pred_check
      _
    $region19: #{tpu_custom_call.1} parent=1 // pred_check_branch
      %32 = sbr.rel (0) target = $region21
    $region20: #{tpu_custom_call.1} parent=1 // pred_region
      _
    $region21: #{tpu_custom_call.1} parent=1 // pred_fallthru
      _
    // Predicated region
    $region22: #{tpu_custom_call.1} parent=1 // pred_check
      _
    $region23: #{tpu_custom_call.1} parent=1 // pred_check_branch
      %34 = sbr.rel (0) target = $region25
    $region24: #{tpu_custom_call.1} parent=1 // pred_region
      %36 = dma.done [#allocation3], 4096
    $region25: #{tpu_custom_call.1} parent=1 // pred_fallthru
      _
    %v37 = vld [vmem:[%s0] sm:$0xff]
    %v38 = vld [vmem:[#allocation2] sm:$0xff]
    %v39 = vld [vmem:[#allocation2 + $0x8] sm:$0xff]
    %v40 = vld [vmem:[#allocation2 + $0x10] sm:$0xff]
    %v41 = vld [vmem:[#allocation2 + $0x18] sm:$0xff]
    %v42 = vld [vmem:[#allocation2 + $0x20] sm:$0xff]
    %v43 = vld [vmem:[#allocation2 + $0x28] sm:$0xff]
    %v44 = vld [vmem:[#allocation2 + $0x30] sm:$0xff]
    %v45 = vld [vmem:[#allocation2 + $0x38] sm:$0xff]
    %v46 = vld [vmem:[#allocation2 + $0x40] sm:$0xff]
    %v47 = vld [vmem:[#allocation2 + $0x48] sm:$0xff]
    %v48 = vld [vmem:[#allocation2 + $0x50] sm:$0xff]
    %v49 = vld [vmem:[#allocation2 + $0x58] sm:$0xff]
    %v50 = vld [vmem:[#allocation2 + $0x60] sm:$0xff]
    %v51 = vld [vmem:[#allocation2 + $0x68] sm:$0xff]
    %v52 = vld [vmem:[#allocation2 + $0x70] sm:$0xff]
    %v53 = vld [vmem:[#allocation2 + $0x78] sm:$0xff]
    %v54 = vld [vmem:[#allocation2 + $0x80] sm:$0xff]
    %v55 = vld [vmem:[#allocation2 + $0x88] sm:$0xff]
    %v56 = vld [vmem:[#allocation2 + $0x90] sm:$0xff]
    %v57 = vld [vmem:[#allocation2 + $0x98] sm:$0xff]
    %v58 = vld [vmem:[#allocation2 + $0xa0] sm:$0xff]
    %v59 = vld [vmem:[#allocation2 + $0xa8] sm:$0xff]
    %v60 = vld [vmem:[#allocation2 + $0xb0] sm:$0xff]
    %v61 = vld [vmem:[#allocation2 + $0xb8] sm:$0xff]
    %v62 = vld [vmem:[#allocation2 + $0xc0] sm:$0xff]
    %v63 = vld [vmem:[#allocation2 + $0xc8] sm:$0xff]
    %v64 = vld [vmem:[#allocation2 + $0xd0] sm:$0xff]
    %v65 = vld [vmem:[#allocation2 + $0xd8] sm:$0xff]
    %v66 = vld [vmem:[#allocation2 + $0xe0] sm:$0xff]
    %v67 = vld [vmem:[#allocation2 + $0xe8] sm:$0xff]
    %v68 = vld [vmem:[#allocation2 + $0xf0] sm:$0xff]
    %v69 = vld [vmem:[#allocation2 + $0xf8] sm:$0xff]
    %v70 = vld [vmem:[%s2] sm:$0x1]
    %v72 = vperm.slane %v70, 0
    %75 = vst [vmem:[#allocation1] ss:$2 sm:$0xff] %v37
    %v76 = vld.sshfl [vmem:[#allocation1] sm:$0xff pattern:$0x75316420]
    %v77 = vld.sshfl [vmem:[#allocation1 + $0x8] sm:$0xff pattern:$0x75316420]
    %80 = vmatpush.msra.mxu0 %v53
    %81 = vmatpush.msra.mxu0 %v52
    %82 = vmatpush.msra.mxu0 %v51
    %83 = vmatpush.msra.mxu0 %v50
    %84 = vmatpush.msra.mxu0 %v49
    %85 = vmatpush.msra.mxu0 %v48
    %86 = vmatpush.msra.mxu0 %v47
    %87 = vmatpush.msra.mxu0 %v46
    %88 = vmatpush.msra.mxu0 %v45
    %89 = vmatpush.msra.mxu0 %v44
    %90 = vmatpush.msra.mxu0 %v43
    %91 = vmatpush.msra.mxu0 %v42
    %92 = vmatpush.msra.mxu0 %v41
    %93 = vmatpush.msra.mxu0 %v40
    %94 = vmatpush.msra.mxu0 %v39
    %95 = vmatpush.msra.mxu0 %v38
    %96 = vmatmul.f32.gmra.mxu0 %v76
    %v97 = vpop.f32.mrf.mxu0
    %v98 = vadd.f32 %v72, %v97
    %99 = vdwg.mxu0
    %100 = vmatpush.msra.mxu0 %v69
    %101 = vmatpush.msra.mxu0 %v68
    %102 = vmatpush.msra.mxu0 %v67
    %103 = vmatpush.msra.mxu0 %v66
    %104 = vmatpush.msra.mxu0 %v65
    %105 = vmatpush.msra.mxu0 %v64
    %106 = vmatpush.msra.mxu0 %v63
    %107 = vmatpush.msra.mxu0 %v62
    %108 = vmatpush.msra.mxu0 %v61
    %109 = vmatpush.msra.mxu0 %v60
    %110 = vmatpush.msra.mxu0 %v59
    %111 = vmatpush.msra.mxu0 %v58
    %112 = vmatpush.msra.mxu0 %v57
    %113 = vmatpush.msra.mxu0 %v56
    %114 = vmatpush.msra.mxu0 %v55
    %115 = vmatpush.msra.mxu0 %v54
    %116 = vmatmul.f32.gmra.mxu0 %v77
    %v117 = vpop.f32.mrf.mxu0
    %v118 = vadd.f32 %v98, %v117
    %119 = vdwg.mxu0
    %v120 = vmax.f32 %v118, 0.0
    %v121 = vld [vmem:[%s3] sm:$0xff]
    %v122 = vld [vmem:[%s3 + $0x8] sm:$0xff]
    %v123 = vld [vmem:[%s3 + $0x10] sm:$0xff]
    %v124 = vld [vmem:[%s3 + $0x18] sm:$0xff]
    %v125 = vld [vmem:[%s3 + $0x20] sm:$0xff]
    %v126 = vld [vmem:[%s3 + $0x28] sm:$0xff]
    %v127 = vld [vmem:[%s3 + $0x30] sm:$0xff]
    %v128 = vld [vmem:[%s3 + $0x38] sm:$0xff]
    %v129 = vld [vmem:[%s3 + $0x40] sm:$0xff]
    %v130 = vld [vmem:[%s3 + $0x48] sm:$0xff]
    %v131 = vld [vmem:[%s3 + $0x50] sm:$0xff]
    %v132 = vld [vmem:[%s3 + $0x58] sm:$0xff]
    %v133 = vld [vmem:[%s3 + $0x60] sm:$0xff]
    %v134 = vld [vmem:[%s3 + $0x68] sm:$0xff]
    %v135 = vld [vmem:[%s3 + $0x70] sm:$0xff]
    %v136 = vld [vmem:[%s3 + $0x78] sm:$0xff]
    %v137 = vld [vmem:[%s4] sm:$0x1]
    %v139 = vperm.slane %v137, 0
    %141 = vmatpush.msra.mxu0 %v136
    %142 = vmatpush.msra.mxu0 %v135
    %143 = vmatpush.msra.mxu0 %v134
    %144 = vmatpush.msra.mxu0 %v133
    %145 = vmatpush.msra.mxu0 %v132
    %146 = vmatpush.msra.mxu0 %v131
    %147 = vmatpush.msra.mxu0 %v130
    %148 = vmatpush.msra.mxu0 %v129
    %149 = vmatpush.msra.mxu0 %v128
    %150 = vmatpush.msra.mxu0 %v127
    %151 = vmatpush.msra.mxu0 %v126
    %152 = vmatpush.msra.mxu0 %v125
    %153 = vmatpush.msra.mxu0 %v124
    %154 = vmatpush.msra.mxu0 %v123
    %155 = vmatpush.msra.mxu0 %v122
    %156 = vmatpush.msra.mxu0 %v121
    %157 = vmatmul.f32.gmra.mxu0 %v120
    %v158 = vpop.f32.mrf.mxu0
    %v159 = vadd.f32 %v139, %v158
    %160 = vdwg.mxu0
    %v161 = vxor.u32 %v159, 2147483648
    %v162 = vmul.f32 %v161, 1.442695
    %v163 = vpow.pop %v162
    %v164 = vadd.f32 %v163, 1.0
    %v165 = vrcp.pop %v164
    %v166 = vmul.f32 %v164, %v165
    %v167 = vsub.f32 1.0, %v166
    %v168 = vmul.f32 %v165, %v167
    %v169 = vadd.f32 %v165, %v168
    %vm170 = vweird.f32 %v164
    %vm171 = vweird.f32 %v165
    %vm172 = vmor %vm170, %vm171
    %v173 = vsel %vm172, %v165, %v169
    %v174 = vand.u32 2147483647, %v164
    %vm175 = vcmp.eq.f32.partialorder %v174, 8.507059e+37
    %v176 = vand.u32 %v164, 2147483648
    %v177 = vor.u32 1.1754944e-38, %v176
    %v178 = vsel %vm175, %v177, %v173
    %v179 = vmul.f32 1.0, %v178
    %vm180 = vcmask 289792
    %181 = vst.msk [vmem:[#allocation5] sm:$0xf] %vm180, %v179
    // Predicated region
    $region26: #{tpu_custom_call.1} parent=1 // pred_check
      _
    $region27: #{tpu_custom_call.1} parent=1 // pred_check_branch
      %183 = sbr.rel (0) target = $region29
    $region28: #{tpu_custom_call.1} parent=1 // pred_region
      %185 = vsyncadd [#allocation4], 0
      %s187 = sshll.u32 [#allocation5], 4
      %s188 = int_to_ptr.vmem [resolvable:$true] %s187
      %s189 = sshll.u32 %s5, 4
      %s190 = int_to_ptr.hbm [resolvable:$true] %s189
      %192 = dma.vmem_to_hbm [thread:$0]  %s188, 64, %s190, [#allocation4]
    $region29: #{tpu_custom_call.1} parent=1 // pred_fallthru
      _
    // Predicated region
    $region30: #{tpu_custom_call.1} parent=1 // pred_check
      _
    $region31: #{tpu_custom_call.1} parent=1 // pred_check_branch
      %194 = sbr.rel (0) target = $region33
    $region32: #{tpu_custom_call.1} parent=1 // pred_region
      %196 = dma.done [#allocation4], 64
    $region33: #{tpu_custom_call.1} parent=1 // pred_fallthru
      _
    %197 = vsyncpa [#allocation3], 1
    %198 = vsyncpa [#allocation4], 1

</llo_original>
